<compile_context>
chip_gen: v5e
topology: v5e:2x2
jax: 0.10.0
libtpu: 0.0.40
codegen_flags: <defaults>
</compile_context>

<pallas_src>
import jax
import jax.numpy as jnp
from jax.experimental import pallas as pl
from jax.experimental.pallas import tpu as pltpu


def _round_up(x, m):
    return (x + m - 1) // m * m


def _conv2d_packed_kernel(x_ref, w_ref, b_ref, o_ref):
    # x_ref : (BG, H, LP)  VMEM  -- BG lane-packed groups of P images, lane-dense.
    # w_ref : (KH, KW)     SMEM  -- scalar filter taps.
    # b_ref : (1, 1)       SMEM  -- scalar bias.
    # o_ref : (BG, H, LP)  VMEM  -- full-block lane-dense store; the wrapper
    #                              discards each image's (KH-1) tail rows and
    #                              (KW-1) tail cols (they hold wrapped garbage).
    KH, KW = w_ref.shape
    _, H, LP = x_ref.shape

    # Single load + single upcast, reused for all taps.
    xv = x_ref[...].astype(jnp.float32)                  # (BG, H, LP)

    # Bias folded into the accumulator init (saves one full-block VPU add).
    acc = jnp.full(xv.shape, b_ref[0, 0], dtype=jnp.float32)

    # Fully-unrolled KH*KW shift-accumulate.  Shifts are XLU rotations
    # (pltpu.roll == jnp.roll; shift = n - k is a left-roll by k).  Wrapped
    # lanes/sublanes only land in discarded per-image tail cols/rows.
    # j outer so only one lane-shifted copy is live at a time.
    for j in range(KW):
        xj = pltpu.roll(xv, shift=LP - j, axis=2) if j else xv
        for i in range(KH):
            xij = pltpu.roll(xj, shift=H - i, axis=1) if i else xj
            acc = acc + w_ref[i, j] * xij

    o_ref[...] = acc.astype(o_ref.dtype)


def scipy_conv2d_batched(xs, filt, bias):
    """Valid cross-correlation + bias for a batch of images (N, H, W)."""
    N, H, W = xs.shape
    KH, KW = filt.shape
    OH, OW = H - KH + 1, W - KW + 1

    # Pack P images side-by-side along the 128-lane dim.
    P = max(1, 128 // W)
    LPW = P * W
    LP = _round_up(LPW, 128)              # 128 whenever W <= 128

    # Batch-block the grid: BG packed groups (= BG*P images) per grid step,
    # targeting ~0.5 MiB input blocks.  Double-buffered in+out plus the
    # in-kernel temporaries stay well under VMEM limits on v5e/v6e/v7x.
    G = -(-N // P)                                            # packed groups needed
    BG = max(1, min(G, (512 * 1024) // (H * LP * 4)))
    GP = -(-G // BG) * BG                                     # grid divides evenly
    NP = GP * P

    # Pack: (NP, H, W) -> (GP, H, P*W), pad lanes to LP if P*W < 128.
    xs_p = jnp.pad(xs, ((0, NP - N), (0, 0), (0, 0)))
    packed = (xs_p.reshape(GP, P, H, W)
              .transpose(0, 2, 1, 3)
              .reshape(GP, H, LPW))
    if LP != LPW:
        packed = jnp.pad(packed, ((0, 0), (0, 0), (0, LP - LPW)))

    out_p = pl.pallas_call(
        _conv2d_packed_kernel,
        out_shape=jax.ShapeDtypeStruct((GP, H, LP), xs.dtype),
        grid_spec=pltpu.PrefetchScalarGridSpec(
            num_scalar_prefetch=0,
            grid=(GP // BG,),
            in_specs=[
                pl.BlockSpec((BG, H, LP), lambda g: (g, 0, 0)),       # packed images
                pl.BlockSpec(memory_space=pltpu.MemorySpace.SMEM),    # filter taps
                pl.BlockSpec(memory_space=pltpu.MemorySpace.SMEM),    # bias
            ],
            out_specs=pl.BlockSpec((BG, H, LP), lambda g: (g, 0, 0)),
        ),
        compiler_params=pltpu.CompilerParams(
            dimension_semantics=("parallel",),
            vmem_limit_bytes=32 * 1024 * 1024,   # explicit: v5e scoped default is 16 MiB
        ),
    )(packed, filt, bias)

    # Unpack: drop padded lanes, per-image tail rows/cols, and padded images.
    out = (out_p[:, :OH, :LPW]
           .reshape(GP, OH, P, W)
           .transpose(0, 2, 1, 3)
           .reshape(NP, OH, W)[:N, :, :OW])
    return out


def scipy_conv2d(x, filt, bias):
    """Single-image forward, exactly like ScipyConv2d.forward."""
    return scipy_conv2d_batched(x[None], filt, bias)[0]


def _ref_correlate2d_valid(x, filt, bias):
    # XLA's conv op IS cross-correlation (no kernel flip), same as correlate2d.
    out = jax.lax.conv_general_dilated(
        x[None, None].astype(jnp.float32),
        filt[None, None].astype(jnp.float32),
        window_strides=(1, 1),
        padding="VALID",
    )[0, 0]
    return (out + bias[0, 0]).astype(x.dtype)


if __name__ == "__main__":
    key = jax.random.PRNGKey(0)
    k_x, k_w, k_b, k_xb = jax.random.split(key, 4)

    # Shapes consistent with the tutorial module: ScipyConv2d(3, 3) on a 16x16 image.
    H, W = 16, 16
    KH, KW = 3, 3

    x = jax.random.normal(k_x, (H, W), dtype=jnp.float32)
    filt = jax.random.normal(k_w, (KH, KW), dtype=jnp.float32)   # Parameter(torch.randn(3, 3))
    bias = jax.random.normal(k_b, (1, 1), dtype=jnp.float32)     # Parameter(torch.randn(1, 1))

    # Single-image forward (module semantics).
    out = jax.block_until_ready(scipy_conv2d(x, filt, bias))
    ref = _ref_correlate2d_valid(x, filt, bias)
    assert out.shape == (H - KH + 1, W - KW + 1)
    assert jnp.allclose(out, ref, atol=1e-4, rtol=1e-4)

    # Batched path: lane-packed (8 images / 128 lanes), batch-blocked grid.
    N = 64
    xb = jax.random.normal(k_xb, (N, H, W), dtype=jnp.float32)
    outb = jax.block_until_ready(scipy_conv2d_batched(xb, filt, bias))
    refb = jax.vmap(lambda im: _ref_correlate2d_valid(im, filt, bias))(xb)
    assert outb.shape == (N, H - KH + 1, W - KW + 1)
    assert jnp.allclose(outb, refb, atol=1e-4, rtol=1e-4)

    print("KERNEL_OK")
</pallas_src>

<mosaic_0001>
module attributes {stable_mosaic.version = 11 : i64} {
  func.func @_conv2d_packed_kernel(%arg0: i32, %arg1: memref<1x16x128xf32, #tpu.memory_space<vmem>>, %arg2: memref<3x3xf32, #tpu.memory_space<smem>>, %arg3: memref<1x1xf32, #tpu.memory_space<smem>>, %arg4: memref<1x16x128xf32, #tpu.memory_space<vmem>>) attributes {dimension_semantics = [#tpu.dimension_semantics<parallel>], iteration_bounds = array<i64: 1>, scalar_prefetch = 0 : i64, scratch_operands = 0 : i64, tpu.core_type = #tpu.core_type<tc>, window_params = [{transform_indices = @transform_0, window_bounds = array<i64: 1, 16, 128>}, {transform_indices = @transform_1, window_bounds = array<i64: 3, 3>}, {transform_indices = @transform_2, window_bounds = array<i64: 1, 1>}, {transform_indices = @transform_3, window_bounds = array<i64: 1, 16, 128>}]} {
    %c0 = arith.constant 0 : index
    %c0_0 = arith.constant 0 : index
    %c0_1 = arith.constant 0 : index
    %0 = vector.load %arg1[%c0, %c0_0, %c0_1] : memref<1x16x128xf32, #tpu.memory_space<vmem>>, vector<1x16x128xf32>
    %c0_2 = arith.constant 0 : index
    %c0_3 = arith.constant 0 : index
    %1 = memref.load %arg3[%c0_2, %c0_3] : memref<1x1xf32, #tpu.memory_space<smem>>
    %2 = vector.broadcast %1 : f32 to vector<1x16x128xf32>
    %c0_4 = arith.constant 0 : index
    %c0_5 = arith.constant 0 : index
    %3 = memref.load %arg2[%c0_4, %c0_5] : memref<3x3xf32, #tpu.memory_space<smem>>
    %4 = vector.broadcast %3 : f32 to vector<1x16x128xf32>
    %5 = arith.mulf %4, %0 : vector<1x16x128xf32>
    %6 = arith.addf %2, %5 : vector<1x16x128xf32>
    %c15_i32 = arith.constant 15 : i32
    %7 = tpu.dynamic_rotate %0 by %c15_i32 dim 1 : vector<1x16x128xf32>, i32 -> vector<1x16x128xf32>
    %c1 = arith.constant 1 : index
    %c0_6 = arith.constant 0 : index
    %8 = memref.load %arg2[%c1, %c0_6] : memref<3x3xf32, #tpu.memory_space<smem>>
    %9 = vector.broadcast %8 : f32 to vector<1x16x128xf32>
    %10 = arith.mulf %9, %7 : vector<1x16x128xf32>
    %11 = arith.addf %6, %10 : vector<1x16x128xf32>
    %c14_i32 = arith.constant 14 : i32
    %12 = tpu.dynamic_rotate %0 by %c14_i32 dim 1 : vector<1x16x128xf32>, i32 -> vector<1x16x128xf32>
    %c2 = arith.constant 2 : index
    %c0_7 = arith.constant 0 : index
    %13 = memref.load %arg2[%c2, %c0_7] : memref<3x3xf32, #tpu.memory_space<smem>>
    %14 = vector.broadcast %13 : f32 to vector<1x16x128xf32>
    %15 = arith.mulf %14, %12 : vector<1x16x128xf32>
    %16 = arith.addf %11, %15 : vector<1x16x128xf32>
    %c127_i32 = arith.constant 127 : i32
    %17 = tpu.dynamic_rotate %0 by %c127_i32 dim 2 : vector<1x16x128xf32>, i32 -> vector<1x16x128xf32>
    %c0_8 = arith.constant 0 : index
    %c1_9 = arith.constant 1 : index
    %18 = memref.load %arg2[%c0_8, %c1_9] : memref<3x3xf32, #tpu.memory_space<smem>>
    %19 = vector.broadcast %18 : f32 to vector<1x16x128xf32>
    %20 = arith.mulf %19, %17 : vector<1x16x128xf32>
    %21 = arith.addf %16, %20 : vector<1x16x128xf32>
    %c15_i32_10 = arith.constant 15 : i32
    %22 = tpu.dynamic_rotate %17 by %c15_i32_10 dim 1 : vector<1x16x128xf32>, i32 -> vector<1x16x128xf32>
    %c1_11 = arith.constant 1 : index
    %c1_12 = arith.constant 1 : index
    %23 = memref.load %arg2[%c1_11, %c1_12] : memref<3x3xf32, #tpu.memory_space<smem>>
    %24 = vector.broadcast %23 : f32 to vector<1x16x128xf32>
    %25 = arith.mulf %24, %22 : vector<1x16x128xf32>
    %26 = arith.addf %21, %25 : vector<1x16x128xf32>
    %c14_i32_13 = arith.constant 14 : i32
    %27 = tpu.dynamic_rotate %17 by %c14_i32_13 dim 1 : vector<1x16x128xf32>, i32 -> vector<1x16x128xf32>
    %c2_14 = arith.constant 2 : index
    %c1_15 = arith.constant 1 : index
    %28 = memref.load %arg2[%c2_14, %c1_15] : memref<3x3xf32, #tpu.memory_space<smem>>
    %29 = vector.broadcast %28 : f32 to vector<1x16x128xf32>
    %30 = arith.mulf %29, %27 : vector<1x16x128xf32>
    %31 = arith.addf %26, %30 : vector<1x16x128xf32>
    %c126_i32 = arith.constant 126 : i32
    %32 = tpu.dynamic_rotate %0 by %c126_i32 dim 2 : vector<1x16x128xf32>, i32 -> vector<1x16x128xf32>
    %c0_16 = arith.constant 0 : index
    %c2_17 = arith.constant 2 : index
    %33 = memref.load %arg2[%c0_16, %c2_17] : memref<3x3xf32, #tpu.memory_space<smem>>
    %34 = vector.broadcast %33 : f32 to vector<1x16x128xf32>
    %35 = arith.mulf %34, %32 : vector<1x16x128xf32>
    %36 = arith.addf %31, %35 : vector<1x16x128xf32>
    %c15_i32_18 = arith.constant 15 : i32
    %37 = tpu.dynamic_rotate %32 by %c15_i32_18 dim 1 : vector<1x16x128xf32>, i32 -> vector<1x16x128xf32>
    %c1_19 = arith.constant 1 : index
    %c2_20 = arith.constant 2 : index
    %38 = memref.load %arg2[%c1_19, %c2_20] : memref<3x3xf32, #tpu.memory_space<smem>>
    %39 = vector.broadcast %38 : f32 to vector<1x16x128xf32>
    %40 = arith.mulf %39, %37 : vector<1x16x128xf32>
    %41 = arith.addf %36, %40 : vector<1x16x128xf32>
    %c14_i32_21 = arith.constant 14 : i32
    %42 = tpu.dynamic_rotate %32 by %c14_i32_21 dim 1 : vector<1x16x128xf32>, i32 -> vector<1x16x128xf32>
    %c2_22 = arith.constant 2 : index
    %c2_23 = arith.constant 2 : index
    %43 = memref.load %arg2[%c2_22, %c2_23] : memref<3x3xf32, #tpu.memory_space<smem>>
    %44 = vector.broadcast %43 : f32 to vector<1x16x128xf32>
    %45 = arith.mulf %44, %42 : vector<1x16x128xf32>
    %46 = arith.addf %41, %45 : vector<1x16x128xf32>
    %c0_24 = arith.constant 0 : index
    %c0_25 = arith.constant 0 : index
    %c0_26 = arith.constant 0 : index
    %47 = vector.load %arg4[%c0_24, %c0_25, %c0_26] : memref<1x16x128xf32, #tpu.memory_space<vmem>>, vector<1x16x128xf32>
    tpu.vector_store %arg4[%c0_24, %c0_25, %c0_26], %46 {strides = array<i32>} : memref<1x16x128xf32, #tpu.memory_space<vmem>>, vector<1x16x128xf32>,
    return
  }
  func.func @transform_0(%arg0: i32) -> (i32, i32, i32) {
    %c0_i32 = arith.constant 0 : i32
    %c0_i32_0 = arith.constant 0 : i32
    %c0_i32_1 = arith.constant 0 : i32
    return %arg0, %c0_i32, %c0_i32_0 : i32, i32, i32
  }
  func.func @transform_1(%arg0: i32) -> (i32, i32) {
    %c0_i32 = arith.constant 0 : i32
    %c0_i32_0 = arith.constant 0 : i32
    %c0_i32_1 = arith.constant 0 : i32
    return %c0_i32, %c0_i32_0 : i32, i32
  }
  func.func @transform_2(%arg0: i32) -> (i32, i32) {
    %c0_i32 = arith.constant 0 : i32
    %c0_i32_0 = arith.constant 0 : i32
    %c0_i32_1 = arith.constant 0 : i32
    return %c0_i32, %c0_i32_0 : i32, i32
  }
  func.func @transform_3(%arg0: i32) -> (i32, i32, i32) {
    %c0_i32 = arith.constant 0 : i32
    %c0_i32_0 = arith.constant 0 : i32
    %c0_i32_1 = arith.constant 0 : i32
    return %arg0, %c0_i32, %c0_i32_0 : i32, i32, i32
  }
}

</mosaic_0001>

<llo_original>
// kernel: tpu_custom_call.1
$region0: #{tpu_custom_call.1}
  #allocation0 [shape = 'u32[]', space=smem, size = 0x4, offset = 0x4, fixed_abs, tag = 'smem constant byte address 0x4 - core index']
  #allocation1 [shape = 'u32[72,128]{1,0:T(1,128)}', space=vmem, size = 0x9000, scoped, tag = 'internal scratch']
  #allocation2 [shape = 'f32[1,1]{1,0:T(1,128)S(6)}', space=smem, size = 0x200, scoped, tag = 'scoped memory for tpu_custom_call.1']
  %s0 = inlined_call_operand.hbm [shape: f32[1,16,128], index: 0, kind: input, shape index: {}]
  %s1 = inlined_call_operand.hbm [shape: f32[3,3], index: 1, kind: input, shape index: {}]
  %s2 = inlined_call_operand.<no memory space> [shape: f32[1,1], index: 2, kind: input, shape index: {}]
  %s3 = inlined_call_operand.hbm [shape: f32[1,16,128], index: 3, kind: output, shape index: {}]
  %s4 = sld [smem:[#allocation0]]
  $region30: #{tpu_custom_call.1} parent=0
    _
  %s6 = ssub.s32 1, %s4
  %s7 = scalar_select 0, %s6, %s4
  %8 = sst [smem:[#allocation2]] %s2
  $region1: #{tpu_custom_call.1} parent=0
    #allocation3 [shape = 'u8[8192]{0}', space=vmem, size = 0x2000, scoped, tag = 'input window, operand 0, single buffered']
    #allocation4 [shape = 's32[1]{0}', space=sflag, size = 0x4, scoped, tag = 'scoped memory for tpu_custom_call.1']
    #allocation5 [shape = 's32[1]{0}', space=sflag, size = 0x4, scoped, tag = 'scoped memory for tpu_custom_call.1']
    #allocation6 [shape = 's32[1]{0}', space=sflag, size = 0x4, scoped, tag = 'scoped memory for tpu_custom_call.1']
    #allocation7 [shape = 'u8[2048]{0}', space=smem, size = 0x800, scoped, tag = 'input window, operand 1, single buffered']
    #allocation8 [shape = 'u8[8192]{0}', space=vmem, size = 0x2000, scoped, tag = 'output window, operand 0, single buffered']
    %9 = vsyncpa [#allocation4], 0
    %10 = vsyncpa [#allocation6], 0
    %11 = vsyncpa [#allocation5], 0
    // Predicated region
    $region2: #{tpu_custom_call.1} parent=1 // pred_check
      _
    $region3: #{tpu_custom_call.1} parent=1 // pred_check_branch
      %13 = sbr.rel (0) target = $region5
    $region4: #{tpu_custom_call.1} parent=1 // pred_region
      %15 = vsyncadd [#allocation4], 0
      %s16 = sshll.u32 %s0, 4
      %s17 = int_to_ptr.hbm [resolvable:$true] %s16
      %s18 = sshll.u32 [#allocation3], 4
      %s19 = int_to_ptr.vmem [resolvable:$true] %s18
      %24 = dma.hbm_to_vmem [thread:$0]  %s17, 256, %s19, [#allocation4], 128, 128, 8
    $region5: #{tpu_custom_call.1} parent=1 // pred_fallthru
      _
    // Predicated region
    $region6: #{tpu_custom_call.1} parent=1 // pred_check
      _
    $region7: #{tpu_custom_call.1} parent=1 // pred_check_branch
      %26 = sbr.rel (0) target = $region9
    $region8: #{tpu_custom_call.1} parent=1 // pred_region
      %28 = vsyncadd [#allocation6], 0
      %s30 = sshll.u32 %s1, 4
      %s31 = int_to_ptr.hbm [resolvable:$true] %s30
      %33 = dma.hbm_to_smem %s31, 64, [#allocation7], [#allocation6]
    $region9: #{tpu_custom_call.1} parent=1 // pred_fallthru
      _
    // Predicated region
    $region10: #{tpu_custom_call.1} parent=1 // pred_check
      _
    $region11: #{tpu_custom_call.1} parent=1 // pred_check_branch
      %35 = sbr.rel (0) target = $region13
    $region12: #{tpu_custom_call.1} parent=1 // pred_region
      _
    $region13: #{tpu_custom_call.1} parent=1 // pred_fallthru
      _
    // Predicated region
    $region14: #{tpu_custom_call.1} parent=1 // pred_check
      _
    $region15: #{tpu_custom_call.1} parent=1 // pred_check_branch
      %37 = sbr.rel (0) target = $region17
    $region16: #{tpu_custom_call.1} parent=1 // pred_region
      %39 = dma.done [#allocation4], 256
    $region17: #{tpu_custom_call.1} parent=1 // pred_fallthru
      _
    // Predicated region
    $region18: #{tpu_custom_call.1} parent=1 // pred_check
      _
    $region19: #{tpu_custom_call.1} parent=1 // pred_check_branch
      %41 = sbr.rel (0) target = $region21
    $region20: #{tpu_custom_call.1} parent=1 // pred_region
      %43 = dma.done [#allocation6], 64
    $region21: #{tpu_custom_call.1} parent=1 // pred_fallthru
      _
    %44 = sfence
    %v45 = vld [vmem:[#allocation3] sm:$0xff]
    %v46 = vld [vmem:[#allocation3 + $0x8] sm:$0xff]
    %s47 = sld [smem:[#allocation2]]
    %v48 = vstv %s47
    %s49 = sld [smem:[#allocation7]]
    %v50 = vstv %s49
    %v51 = vmul.f32 %v50, %v45
    %v52 = vmul.f32 %v50, %v46
    %v53 = vadd.f32 %v48, %v51
    %v54 = vadd.f32 %v48, %v52
    %v55 = vrot.slane %v45, 1
    %v56 = vrot.slane %v46, 1
    %v57 = vlaneseq
    %v58 = vshrl.u32 %v57, 7
    %vm59 = vcmp.lt.s32.totalorder %v58, 7
    %v60 = vsel %vm59, %v55, %v56
    %v61 = vsel %vm59, %v56, %v55
    %s62 = sld [smem:[#allocation7 + $0x80]]
    %v63 = vstv %s62
    %v64 = vmul.f32 %v63, %v60
    %v65 = vmul.f32 %v63, %v61
    %v66 = vadd.f32 %v53, %v64
    %v67 = vadd.f32 %v54, %v65
    %v68 = vrot.slane %v45, 2
    %v69 = vrot.slane %v46, 2
    %vm70 = vcmp.lt.s32.totalorder %v58, 6
    %v71 = vsel %vm70, %v68, %v69
    %v72 = vsel %vm70, %v69, %v68
    %s73 = sld [smem:[#allocation7 + $0x100]]
    %v74 = vstv %s73
    %v75 = vmul.f32 %v74, %v71
    %v76 = vmul.f32 %v74, %v72
    %v77 = vadd.f32 %v66, %v75
    %v78 = vadd.f32 %v67, %v76
    %79 = vrot.lane.b32.xlu0 %v45, 127
    %v80 = vpop.permute.xlu0 %79
    %81 = vrot.lane.b32.xlu0 %v46, 127
    %v82 = vpop.permute.xlu0 %81
    %s83 = sld [smem:[#allocation7 + $0x1]]
    %v84 = vstv %s83
    %v85 = vmul.f32 %v84, %v80
    %v86 = vmul.f32 %v84, %v82
    %v87 = vadd.f32 %v77, %v85
    %v88 = vadd.f32 %v78, %v86
    %v89 = vrot.slane %v80, 1
    %v90 = vrot.slane %v82, 1
    %v91 = vsel %vm59, %v89, %v90
    %v92 = vsel %vm59, %v90, %v89
    %s93 = sld [smem:[#allocation7 + $0x81]]
    %v94 = vstv %s93
    %v95 = vmul.f32 %v94, %v91
    %v96 = vmul.f32 %v94, %v92
    %v97 = vadd.f32 %v87, %v95
    %v98 = vadd.f32 %v88, %v96
    %v99 = vrot.slane %v80, 2
    %v100 = vrot.slane %v82, 2
    %v101 = vsel %vm70, %v99, %v100
    %v102 = vsel %vm70, %v100, %v99
    %s103 = sld [smem:[#allocation7 + $0x101]]
    %v104 = vstv %s103
    %v105 = vmul.f32 %v104, %v101
    %v106 = vmul.f32 %v104, %v102
    %v107 = vadd.f32 %v97, %v105
    %v108 = vadd.f32 %v98, %v106
    %109 = vrot.lane.b32.xlu0 %v45, 126
    %v110 = vpop.permute.xlu0 %109
    %111 = vrot.lane.b32.xlu0 %v46, 126
    %v112 = vpop.permute.xlu0 %111
    %s113 = sld [smem:[#allocation7 + $0x2]]
    %v114 = vstv %s113
    %v115 = vmul.f32 %v114, %v110
    %v116 = vmul.f32 %v114, %v112
    %v117 = vadd.f32 %v107, %v115
    %v118 = vadd.f32 %v108, %v116
    %v119 = vrot.slane %v110, 1
    %v120 = vrot.slane %v112, 1
    %v121 = vsel %vm59, %v119, %v120
    %v122 = vsel %vm59, %v120, %v119
    %s123 = sld [smem:[#allocation7 + $0x82]]
    %v124 = vstv %s123
    %v125 = vmul.f32 %v124, %v121
    %v126 = vmul.f32 %v124, %v122
    %v127 = vadd.f32 %v117, %v125
    %v128 = vadd.f32 %v118, %v126
    %v129 = vrot.slane %v110, 2
    %v130 = vrot.slane %v112, 2
    %v131 = vsel %vm70, %v129, %v130
    %v132 = vsel %vm70, %v130, %v129
    %s133 = sld [smem:[#allocation7 + $0x102]]
    %v134 = vstv %s133
    %v135 = vmul.f32 %v134, %v131
    %v136 = vmul.f32 %v134, %v132
    %v137 = vadd.f32 %v127, %v135
    %v138 = vadd.f32 %v128, %v136
    %139 = vst [vmem:[#allocation8] sm:$0xff] %v137
    %140 = vst [vmem:[#allocation8 + $0x8] sm:$0xff] %v138
    // Predicated region
    $region22: #{tpu_custom_call.1} parent=1 // pred_check
      _
    $region23: #{tpu_custom_call.1} parent=1 // pred_check_branch
      %142 = sbr.rel (0) target = $region25
    $region24: #{tpu_custom_call.1} parent=1 // pred_region
      %144 = vsyncadd [#allocation5], 0
      %s145 = sshll.u32 [#allocation8], 4
      %s146 = int_to_ptr.vmem [resolvable:$true] %s145
      %s147 = sshll.u32 %s3, 4
      %s148 = int_to_ptr.hbm [resolvable:$true] %s147
      %153 = dma.vmem_to_hbm [thread:$0]  %s146, 256, %s148, [#allocation5], 128, 128, 8
    $region25: #{tpu_custom_call.1} parent=1 // pred_fallthru
      _
    // Predicated region
    $region26: #{tpu_custom_call.1} parent=1 // pred_check
      _
    $region27: #{tpu_custom_call.1} parent=1 // pred_check_branch
      %155 = sbr.rel (0) target = $region29
    $region28: #{tpu_custom_call.1} parent=1 // pred_region
      %157 = dma.done [#allocation5], 256
    $region29: #{tpu_custom_call.1} parent=1 // pred_fallthru
      _
    %158 = vsyncpa [#allocation4], 1
    %159 = vsyncpa [#allocation5], 1
    %160 = vsyncpa [#allocation6], 1

</llo_original>
